<compile_context>
chip_gen: v7x
topology: tpu7x:2x2x1
jax: 0.10.0
libtpu: 0.0.40
codegen_flags: <defaults>
</compile_context>

<pallas_src>
import functools

import jax
import jax.numpy as jnp
from jax.experimental import pallas as pl
from jax.experimental.pallas import tpu as pltpu

IN_DIM = 20
HIDDEN_DIM = 256
OUT_DIM = 10
OUT_PAD = 128  # lane-dense padded output width -> unmasked full-vreg stores


def _round_up(n, m):
    return (n + m - 1) // m * m


def mlp_kernel(x_ref, w1_ref, b1_ref, w2_ref, b2_ref, o_ref):
    # x arrives as f32; cast to bf16 on the VPU (massive slack) for the MXU.
    x = x_ref[...].astype(jnp.bfloat16)                        # (TB, 20)
    # Layer 1: bf16 MXU matmul, f32 accumulate; bias + ReLU in f32 on the VPU.
    h = jnp.dot(x, w1_ref[...], preferred_element_type=jnp.float32)
    h = jnp.maximum(h + b1_ref[...], 0.0)                      # (TB, 256) f32
    # Layer 2: cast activations to bf16 for the MXU, accumulate in f32.
    y = jnp.dot(h.astype(w2_ref.dtype), w2_ref[...],
                preferred_element_type=jnp.float32)            # (TB, 128) f32
    # bf16 store: halves the dominant HBM writeback stream.
    o_ref[...] = (y + b2_ref[...]).astype(o_ref.dtype)


def prepare_params(w1, b1, w2, b2):
    """One-time param prep: bf16 MXU weights, f32 biases, second layer padded
    to 128 output lanes (zeros in columns 10..127)."""
    w1p = w1.astype(jnp.bfloat16)                                   # (20, 256)
    b1p = b1.reshape(1, HIDDEN_DIM).astype(jnp.float32)             # (1, 256)
    w2p = jnp.zeros((HIDDEN_DIM, OUT_PAD), jnp.bfloat16)
    w2p = w2p.at[:, :OUT_DIM].set(w2.astype(jnp.bfloat16))          # (256, 128)
    b2p = jnp.zeros((1, OUT_PAD), jnp.float32)
    b2p = b2p.at[:, :OUT_DIM].set(b2.reshape(1, OUT_DIM).astype(jnp.float32))
    return w1p, b1p, w2p, b2p


def _choose_tile(batch, block_b):
    # Target >=4 grid steps at large batch (2-TC sharding + DMA pipelining on
    # v7x) while keeping the sublane count a multiple of 16 (clean bf16
    # packing for the output tile) and capping VMEM via block_b.
    tb = _round_up(max(-(-batch // 4), 1), 16)
    return max(min(block_b, tb), 16)


@functools.partial(jax.jit, static_argnames=("block_b",))
def mlp_forward(x, w1p, b1p, w2p, b2p, *, block_b=4096):
    B = x.shape[0]
    if B == 0:  # guard: empty batch -> no kernel launch
        return jnp.zeros((0, OUT_DIM), jnp.float32)

    tb = _choose_tile(B, block_b)
    grid = (pl.cdiv(B, tb),)  # ragged last tile handled by Pallas OOB masking

    out = pl.pallas_call(
        mlp_kernel,
        out_shape=jax.ShapeDtypeStruct((B, OUT_PAD), jnp.bfloat16),
        grid=grid,
        in_specs=[
            pl.BlockSpec((tb, IN_DIM), lambda i: (i, 0)),           # streamed x (f32)
            pl.BlockSpec((IN_DIM, HIDDEN_DIM), lambda i: (0, 0)),   # resident w1
            pl.BlockSpec((1, HIDDEN_DIM), lambda i: (0, 0)),        # resident b1
            pl.BlockSpec((HIDDEN_DIM, OUT_PAD), lambda i: (0, 0)),  # resident w2
            pl.BlockSpec((1, OUT_PAD), lambda i: (0, 0)),           # resident b2
        ],
        out_specs=pl.BlockSpec((tb, OUT_PAD), lambda i: (i, 0)),
        compiler_params=pltpu.CompilerParams(
            dimension_semantics=("parallel",),
            vmem_limit_bytes=32 * 1024 * 1024,
        ),
    )(x, w1p, b1p, w2p, b2p)
    # Slice the 10 real output columns, hand back f32 to the caller.
    return out[:, :OUT_DIM].astype(jnp.float32)


def init_params(key, in_dim=IN_DIM, hidden_dim=HIDDEN_DIM, out_dim=OUT_DIM):
    # Mirrors nn.Linear's U(-1/sqrt(fan_in), 1/sqrt(fan_in)) init; stored as
    # (in, out) — the transpose of PyTorch's (out, in) layout — so the kernel
    # computes y = x @ W + b directly.
    k1, k2, k3, k4 = jax.random.split(key, 4)
    bound1 = 1.0 / jnp.sqrt(in_dim)
    bound2 = 1.0 / jnp.sqrt(hidden_dim)
    w1 = jax.random.uniform(k1, (in_dim, hidden_dim), jnp.float32, -bound1, bound1)
    b1 = jax.random.uniform(k2, (1, hidden_dim), jnp.float32, -bound1, bound1)
    w2 = jax.random.uniform(k3, (hidden_dim, out_dim), jnp.float32, -bound2, bound2)
    b2 = jax.random.uniform(k4, (1, out_dim), jnp.float32, -bound2, bound2)
    return w1, b1, w2, b2


if __name__ == "__main__":
    key = jax.random.PRNGKey(0)
    kx, kp = jax.random.split(key)

    B = 2
    x = jax.random.normal(kx, (B, IN_DIM), jnp.float32)
    w1, b1, w2, b2 = init_params(kp)
    params = prepare_params(w1, b1, w2, b2)

    out = mlp_forward(x, *params)
    out = jax.block_until_ready(out)
    assert out.shape == (B, OUT_DIM)

    # Pure-JAX reference using the same bf16-rounded MXU operands the kernel
    # sees (f32 accumulation / epilogue); tolerance covers the final bf16
    # rounding of the kernel's output store.
    xb = x.astype(jnp.bfloat16).astype(jnp.float32)
    w1b = w1.astype(jnp.bfloat16).astype(jnp.float32)
    w2b = w2.astype(jnp.bfloat16).astype(jnp.float32)
    h = jnp.maximum(xb @ w1b + b1, 0.0)
    ref = h.astype(jnp.bfloat16).astype(jnp.float32) @ w2b + b2
    assert jnp.allclose(out, ref, atol=3e-2, rtol=3e-2), (
        f"max abs err {jnp.max(jnp.abs(out - ref))}")

    print("KERNEL_OK")
</pallas_src>

<mosaic_0001>
module attributes {stable_mosaic.version = 11 : i64} {
  func.func @mlp_kernel(%arg0: i32, %arg1: memref<16x20xf32, #tpu.memory_space<vmem>>, %arg2: memref<20x256xbf16, #tpu.memory_space<vmem>>, %arg3: memref<1x256xf32, #tpu.memory_space<vmem>>, %arg4: memref<256x128xbf16, #tpu.memory_space<vmem>>, %arg5: memref<1x128xf32, #tpu.memory_space<vmem>>, %arg6: memref<16x128xbf16, #tpu.memory_space<vmem>>) attributes {dimension_semantics = [#tpu.dimension_semantics<parallel>], iteration_bounds = array<i64: 1>, scalar_prefetch = 0 : i64, scratch_operands = 0 : i64, tpu.core_type = #tpu.core_type<tc>, window_params = [{transform_indices = @transform_0, window_bounds = array<i64: 16, 20>}, {pipeline_mode = #tpu.pipeline_mode<synchronous>, transform_indices = @transform_1, window_bounds = array<i64: 20, 256>}, {pipeline_mode = #tpu.pipeline_mode<synchronous>, transform_indices = @transform_2, window_bounds = array<i64: 1, 256>}, {pipeline_mode = #tpu.pipeline_mode<synchronous>, transform_indices = @transform_3, window_bounds = array<i64: 256, 128>}, {pipeline_mode = #tpu.pipeline_mode<synchronous>, transform_indices = @transform_4, window_bounds = array<i64: 1, 128>}, {transform_indices = @transform_5, window_bounds = array<i64: 16, 128>}]} {
    %c0 = arith.constant 0 : index
    %c0_0 = arith.constant 0 : index
    %0 = vector.load %arg1[%c0, %c0_0] : memref<16x20xf32, #tpu.memory_space<vmem>>, vector<16x20xf32>
    %1 = arith.truncf %0 : vector<16x20xf32> to vector<16x20xbf16>
    %c0_1 = arith.constant 0 : index
    %c0_2 = arith.constant 0 : index
    %2 = vector.load %arg2[%c0_1, %c0_2] : memref<20x256xbf16, #tpu.memory_space<vmem>>, vector<20x256xbf16>
    %cst = arith.constant dense<0.000000e+00> : vector<16x256xf32>
    %3 = tpu.matmul %1, %2, %cst {dimension_numbers = #tpu.dot_dimension_numbers<[1], [0], [0], [1], [0, 0, 1, 1], [], []>} : vector<16x20xbf16>, vector<20x256xbf16>, vector<16x256xf32> -> vector<16x256xf32>
    %c0_3 = arith.constant 0 : index
    %c0_4 = arith.constant 0 : index
    %4 = vector.load %arg3[%c0_3, %c0_4] : memref<1x256xf32, #tpu.memory_space<vmem>>, vector<1x256xf32>
    %5 = vector.broadcast %4 : vector<1x256xf32> to vector<16x256xf32>
    %6 = arith.addf %3, %5 : vector<16x256xf32>
    %cst_5 = arith.constant 0.000000e+00 : f32
    %7 = vector.broadcast %cst_5 : f32 to vector<16x256xf32>
    %8 = arith.maximumf %6, %7 : vector<16x256xf32>
    %9 = arith.truncf %8 : vector<16x256xf32> to vector<16x256xbf16>
    %c0_6 = arith.constant 0 : index
    %c0_7 = arith.constant 0 : index
    %10 = vector.load %arg4[%c0_6, %c0_7] : memref<256x128xbf16, #tpu.memory_space<vmem>>, vector<256x128xbf16>
    %cst_8 = arith.constant dense<0.000000e+00> : vector<16x128xf32>
    %11 = tpu.matmul %9, %10, %cst_8 {dimension_numbers = #tpu.dot_dimension_numbers<[1], [0], [0], [1], [0, 0, 1, 1], [], []>} : vector<16x256xbf16>, vector<256x128xbf16>, vector<16x128xf32> -> vector<16x128xf32>
    %c0_9 = arith.constant 0 : index
    %c0_10 = arith.constant 0 : index
    %12 = vector.load %arg5[%c0_9, %c0_10] : memref<1x128xf32, #tpu.memory_space<vmem>>, vector<1x128xf32>
    %13 = vector.broadcast %12 : vector<1x128xf32> to vector<16x128xf32>
    %14 = arith.addf %11, %13 : vector<16x128xf32>
    %15 = arith.truncf %14 : vector<16x128xf32> to vector<16x128xbf16>
    %c0_11 = arith.constant 0 : index
    %c0_12 = arith.constant 0 : index
    %16 = vector.load %arg6[%c0_11, %c0_12] : memref<16x128xbf16, #tpu.memory_space<vmem>>, vector<16x128xbf16>
    tpu.vector_store %arg6[%c0_11, %c0_12], %15 {strides = array<i32>} : memref<16x128xbf16, #tpu.memory_space<vmem>>, vector<16x128xbf16>,
    return
  }
  func.func @transform_0(%arg0: i32) -> (i32, i32) {
    %c0_i32 = arith.constant 0 : i32
    %c0_i32_0 = arith.constant 0 : i32
    return %arg0, %c0_i32 : i32, i32
  }
  func.func @transform_1(%arg0: i32) -> (i32, i32) {
    %c0_i32 = arith.constant 0 : i32
    %c0_i32_0 = arith.constant 0 : i32
    %c0_i32_1 = arith.constant 0 : i32
    return %c0_i32, %c0_i32_0 : i32, i32
  }
  func.func @transform_2(%arg0: i32) -> (i32, i32) {
    %c0_i32 = arith.constant 0 : i32
    %c0_i32_0 = arith.constant 0 : i32
    %c0_i32_1 = arith.constant 0 : i32
    return %c0_i32, %c0_i32_0 : i32, i32
  }
  func.func @transform_3(%arg0: i32) -> (i32, i32) {
    %c0_i32 = arith.constant 0 : i32
    %c0_i32_0 = arith.constant 0 : i32
    %c0_i32_1 = arith.constant 0 : i32
    return %c0_i32, %c0_i32_0 : i32, i32
  }
  func.func @transform_4(%arg0: i32) -> (i32, i32) {
    %c0_i32 = arith.constant 0 : i32
    %c0_i32_0 = arith.constant 0 : i32
    %c0_i32_1 = arith.constant 0 : i32
    return %c0_i32, %c0_i32_0 : i32, i32
  }
  func.func @transform_5(%arg0: i32) -> (i32, i32) {
    %c0_i32 = arith.constant 0 : i32
    %c0_i32_0 = arith.constant 0 : i32
    return %arg0, %c0_i32 : i32, i32
  }
}

</mosaic_0001>

<llo_original>
// kernel: mlp_forward.1
$region0: #{mlp_forward.1}
  #allocation0 [shape = 'u32[]', space=smem, size = 0x4, offset = 0x4, fixed_abs, tag = 'smem constant byte address 0x4 - core index']
  #allocation1 [shape = 'u32[144,128]{1,0:T(1,128)}', space=vmem, size = 0x12000, scoped, tag = 'internal scratch']
  %s0 = inlined_call_operand.hbm [shape: f32[2,20], index: 0, kind: input, shape index: {}]
  %s1 = inlined_call_operand.hbm [shape: bf16[20,256], index: 1, kind: input, shape index: {}]
  %s2 = inlined_call_operand.vmem [shape: f32[1,256], index: 2, kind: input, shape index: {}]
  %s3 = inlined_call_operand.hbm [shape: bf16[256,128], index: 3, kind: input, shape index: {}]
  %s4 = inlined_call_operand.vmem [shape: f32[1,128], index: 4, kind: input, shape index: {}]
  %s5 = inlined_call_operand.vmem [shape: bf16[2,128], index: 5, kind: output, shape index: {}]
  %s6 = sld [smem:[#allocation0]]
  $region72: #{mlp_forward.1} parent=0
    _
  %s8 = ssub.s32 1, %s6
  %s9 = scalar_select 0, %s8, %s6
  $region1: #{mlp_forward.1} parent=0
    #allocation2 [shape = 'u8[8192]{0}', space=vmem, size = 0x2000, scoped, tag = 'input window, operand 0, single buffered']
    #allocation3 [shape = 's32[1]{0}', space=sflag, size = 0x4, scoped, tag = 'scoped memory for mlp_forward.1']
    #allocation4 [shape = 'u8[12288]{0}', space=vmem, size = 0x3000, scoped, tag = 'input window, operand 1, single buffered']
    #allocation5 [shape = 's32[1]{0}', space=sflag, size = 0x4, scoped, tag = 'scoped memory for mlp_forward.1']
    #allocation6 [shape = 'u8[65536]{0}', space=vmem, size = 0x10000, scoped, tag = 'input window, operand 3, single buffered']
    #allocation7 [shape = 'u8[4096]{0}', space=vmem, size = 0x1000, scoped, tag = 'output window, operand 0, single buffered']
    %10 = vsyncpa [#allocation3], 0
    %11 = vsyncpa [#allocation5], 0
    // Predicated region
    $region2: #{mlp_forward.1} parent=1 // pred_check
      _
    $region3: #{mlp_forward.1} parent=1 // pred_check_branch
      %13 = sbr.rel (0) target = $region5
    $region4: #{mlp_forward.1} parent=1 // pred_region
      %s15 = ssub.s32 256, 32
      %16 = vsyncadd [#allocation3], %s15
      %s17 = sshll.u32 [#allocation2], 4
      %s18 = int_to_ptr.vmem [resolvable:$true] %s17
      %23 = dma.hbm_to_vmem [thread:$0]  %s0, 32, %s18, [#allocation3], 32, 32, 2
    $region5: #{mlp_forward.1} parent=1 // pred_fallthru
      _
    // Predicated region
    $region6: #{mlp_forward.1} parent=1 // pred_check
      _
    $region7: #{mlp_forward.1} parent=1 // pred_check_branch
      %25 = sbr.rel (0) target = $region9
    $region8: #{mlp_forward.1} parent=1 // pred_region
      %s27 = ssub.s32 384, 384
      %28 = vsyncadd [#allocation5], %s27
      %s29 = sshll.u32 [#allocation4], 4
      %s30 = int_to_ptr.vmem [resolvable:$true] %s29
      %35 = dma.hbm_to_vmem [thread:$0]  %s1, 384, %s30, [#allocation5], 128, 128, 8
    $region9: #{mlp_forward.1} parent=1 // pred_fallthru
      _
    // Predicated region
    $region10: #{mlp_forward.1} parent=1 // pred_check
      _
    $region11: #{mlp_forward.1} parent=1 // pred_check_branch
      %37 = sbr.rel (0) target = $region13
    $region12: #{mlp_forward.1} parent=1 // pred_region
      _
    $region13: #{mlp_forward.1} parent=1 // pred_fallthru
      _
    // Predicated region
    $region14: #{mlp_forward.1} parent=1 // pred_check
      _
    $region15: #{mlp_forward.1} parent=1 // pred_check_branch
      %39 = sbr.rel (0) target = $region17
    $region16: #{mlp_forward.1} parent=1 // pred_region
      %s41 = ssub.s32 2048, 2048
      %42 = vsyncadd [#allocation5], %s41
      %s43 = sshll.u32 [#allocation6], 4
      %s44 = int_to_ptr.vmem [resolvable:$true] %s43
      %49 = dma.hbm_to_vmem [thread:$0]  %s3, 2048, %s44, [#allocation5], 64, 64, 4
    $region17: #{mlp_forward.1} parent=1 // pred_fallthru
      _
    // Predicated region
    $region18: #{mlp_forward.1} parent=1 // pred_check
      _
    $region19: #{mlp_forward.1} parent=1 // pred_check_branch
      %51 = sbr.rel (0) target = $region21
    $region20: #{mlp_forward.1} parent=1 // pred_region
      _
    $region21: #{mlp_forward.1} parent=1 // pred_fallthru
      _
    // Predicated region
    $region22: #{mlp_forward.1} parent=1 // pred_check
      _
    $region23: #{mlp_forward.1} parent=1 // pred_check_branch
      %53 = sbr.rel (0) target = $region25
    $region24: #{mlp_forward.1} parent=1 // pred_region
      %54 = dma.done [#allocation3], 256
    $region25: #{mlp_forward.1} parent=1 // pred_fallthru
      _
    // Predicated region
    $region26: #{mlp_forward.1} parent=1 // pred_check
      _
    $region27: #{mlp_forward.1} parent=1 // pred_check_branch
      %56 = sbr.rel (0) target = $region29
    $region28: #{mlp_forward.1} parent=1 // pred_region
      %57 = dma.done [#allocation5], 384
    $region29: #{mlp_forward.1} parent=1 // pred_fallthru
      _
    // Predicated region
    $region30: #{mlp_forward.1} parent=1 // pred_check
      _
    $region31: #{mlp_forward.1} parent=1 // pred_check_branch
      %59 = sbr.rel (0) target = $region33
    $region32: #{mlp_forward.1} parent=1 // pred_region
      %60 = dma.done [#allocation5], 2048
    $region33: #{mlp_forward.1} parent=1 // pred_fallthru
      _
    %v62 = vld [vmem:[#allocation2] sm:$0xff]
    %v63 = vld [vmem:[#allocation2 + $0x8] sm:$0xff]
    %v64 = vpack.c.bf16 %v63, %v62
    %v65 = vld [vmem:[#allocation4] sm:$0xff]
    %v66 = vld [vmem:[#allocation4 + $0x8] sm:$0xff]
    %v67 = vld [vmem:[#allocation4 + $0x10] sm:$0x33]
    %v68 = vld [vmem:[%s2] sm:$0x3]
    %v70 = vlaneseq
    %v71 = vshrl.u32 %v70, 7
    %v72 = vsub.s32 0, %v71
    %v73 = vrot.slane %v68, %v72
    %v74 = vlaneseq
    %v75 = vshrl.u32 %v74, 7
    %v76 = vsub.s32 1, %v75
    %v77 = vrot.slane %v68, %v76
    %v83 = vunpack.c.l.b16 %v65
    %v84 = vunpack.c.h.b16 %v65
    %v85 = vunpack.c.l.b16 %v66
    %v86 = vunpack.c.h.b16 %v66
    %v87 = vunpack.c.l.b16 %v67
    %v88 = vunpack.c.h.b16 %v67
    %v89 = vpack.c.b16 %v85, %v83
    %v90 = vpack.c.b16 %v86, %v84
    %v91 = vpack.c.b16 %v87, %v87
    %v92 = vpack.c.b16 %v88, %v88
    %vm95 = vcmask 162816
    %v97 = vsel %vm95, %v64, 0
    %vm99 = vcmask 1041408
    %v101 = vsel %vm99, %v91, 0
    %v104 = vsel %vm99, %v92, 0
    %106 = vmatprep.subr.bf16.mxu0 %v90
    %107 = vmatpush1.bf16.msra.mxu0 %v89
    %108 = vmatprep.subr.bf16.mxu0 %v104
    %109 = vmatpush1.bf16.msra.mxu0 %v101
    %110 = vmatprep.subr.bf16.mxu0 0
    %111 = vmatpush1.bf16.msra.mxu0 0
    %112 = vmatprep.subr.bf16.mxu0 0
    %113 = vmatpush1.bf16.msra.mxu0 0
    %114 = vmatprep.subr.bf16.mxu0 0
    %115 = vmatpush1.bf16.msra.mxu0 0
    %116 = vmatprep.subr.bf16.mxu0 0
    %117 = vmatpush1.bf16.msra.mxu0 0
    %118 = vmatprep.subr.bf16.mxu0 0
    %119 = vmatpush1.bf16.msra.mxu0 0
    %120 = vmatprep.subr.bf16.mxu0 0
    %121 = vmatpush1.bf16.msra.mxu0 0
    %122 = vmatprep.subr.bf16.mxu0 0
    %123 = vmatpush1.bf16.msra.mxu0 0
    %124 = vmatprep.subr.bf16.mxu0 0
    %125 = vmatpush1.bf16.msra.mxu0 0
    %126 = vmatprep.subr.bf16.mxu0 0
    %127 = vmatpush1.bf16.msra.mxu0 0
    %128 = vmatprep.subr.bf16.mxu0 0
    %129 = vmatpush1.bf16.msra.mxu0 0
    %130 = vmatprep.subr.bf16.mxu0 0
    %131 = vmatpush1.bf16.msra.mxu0 0
    %132 = vmatprep.subr.bf16.mxu0 0
    %133 = vmatpush1.bf16.msra.mxu0 0
    %134 = vmatprep.subr.bf16.mxu0 0
    %135 = vmatpush1.bf16.msra.mxu0 0
    %136 = vmatprep.subr.bf16.mxu0 0
    %137 = vmatpush1.bf16.msra.mxu0 0
    %138 = vmatprep.mubr.bf16.mxu0 0
    %139 = vmatmul.mubr.bf16.gmra.mrb[0].mxu0 %v97
    %v140 = vpop.f32.mrb[0].mxu0
    %v141 = vadd.f32 %v73, %v140
    %v142 = vpop.f32.mrb[0].mxu0
    %v143 = vadd.f32 %v77, %v142
    %v144 = vpop.f32.mrb[0].mxu0
    %v145 = vadd.f32 %v73, %v144
    %v146 = vpop.f32.mrb[0].mxu0
    %v147 = vadd.f32 %v77, %v146
    %148 = vdwg.mxu0
    %v149 = vmax.f32 %v141, 0.0
    %v150 = vmax.f32 %v143, 0.0
    %v151 = vmax.f32 %v145, 0.0
    %v152 = vmax.f32 %v147, 0.0
    %v153 = vpack.c.bf16 %v151, %v149
    %v154 = vpack.c.bf16 %v152, %v150
    %v155 = vld [vmem:[#allocation6] sm:$0xf]
    %v156 = vld [vmem:[#allocation6 + $0x4] sm:$0xf]
    %v157 = vld [vmem:[#allocation6 + $0x8] sm:$0xf]
    %v158 = vld [vmem:[#allocation6 + $0xc] sm:$0xf]
    %v159 = vld [vmem:[#allocation6 + $0x10] sm:$0xf]
    %v160 = vld [vmem:[#allocation6 + $0x14] sm:$0xf]
    %v161 = vld [vmem:[#allocation6 + $0x18] sm:$0xf]
    %v162 = vld [vmem:[#allocation6 + $0x1c] sm:$0xf]
    %v163 = vld [vmem:[#allocation6 + $0x20] sm:$0xf]
    %v164 = vld [vmem:[#allocation6 + $0x24] sm:$0xf]
    %v165 = vld [vmem:[#allocation6 + $0x28] sm:$0xf]
    %v166 = vld [vmem:[#allocation6 + $0x2c] sm:$0xf]
    %v167 = vld [vmem:[#allocation6 + $0x30] sm:$0xf]
    %v168 = vld [vmem:[#allocation6 + $0x34] sm:$0xf]
    %v169 = vld [vmem:[#allocation6 + $0x38] sm:$0xf]
    %v170 = vld [vmem:[#allocation6 + $0x3c] sm:$0xf]
    %v171 = vld [vmem:[#allocation6 + $0x40] sm:$0xf]
    %v172 = vld [vmem:[#allocation6 + $0x44] sm:$0xf]
    %v173 = vld [vmem:[#allocation6 + $0x48] sm:$0xf]
    %v174 = vld [vmem:[#allocation6 + $0x4c] sm:$0xf]
    %v175 = vld [vmem:[#allocation6 + $0x50] sm:$0xf]
    %v176 = vld [vmem:[#allocation6 + $0x54] sm:$0xf]
    %v177 = vld [vmem:[#allocation6 + $0x58] sm:$0xf]
    %v178 = vld [vmem:[#allocation6 + $0x5c] sm:$0xf]
    %v179 = vld [vmem:[#allocation6 + $0x60] sm:$0xf]
    %v180 = vld [vmem:[#allocation6 + $0x64] sm:$0xf]
    %v181 = vld [vmem:[#allocation6 + $0x68] sm:$0xf]
    %v182 = vld [vmem:[#allocation6 + $0x6c] sm:$0xf]
    %v183 = vld [vmem:[#allocation6 + $0x70] sm:$0xf]
    %v184 = vld [vmem:[#allocation6 + $0x74] sm:$0xf]
    %v185 = vld [vmem:[#allocation6 + $0x78] sm:$0xf]
    %v186 = vld [vmem:[#allocation6 + $0x7c] sm:$0xf]
    %v187 = vld [vmem:[%s4] sm:$0x1]
    %v189 = vlaneseq
    %v190 = vshrl.u32 %v189, 7
    %v191 = vsub.s32 0, %v190
    %v192 = vrot.slane %v187, %v191
    %v226 = vunpack.c.l.b16 %v155
    %v227 = vunpack.c.l.b16 %v156
    %v228 = vunpack.c.l.b16 %v157
    %v229 = vunpack.c.l.b16 %v158
    %v230 = vunpack.c.l.b16 %v159
    %v231 = vunpack.c.l.b16 %v160
    %v232 = vunpack.c.l.b16 %v161
    %v233 = vunpack.c.l.b16 %v162
    %v234 = vunpack.c.l.b16 %v163
    %v235 = vunpack.c.l.b16 %v164
    %v236 = vunpack.c.l.b16 %v165
    %v237 = vunpack.c.l.b16 %v166
    %v238 = vunpack.c.l.b16 %v167
    %v239 = vunpack.c.l.b16 %v168
    %v240 = vunpack.c.l.b16 %v169
    %v241 = vunpack.c.l.b16 %v170
    %v242 = vunpack.c.l.b16 %v171
    %v243 = vunpack.c.l.b16 %v172
    %v244 = vunpack.c.l.b16 %v173
    %v245 = vunpack.c.l.b16 %v174
    %v246 = vunpack.c.l.b16 %v175
    %v247 = vunpack.c.l.b16 %v176
    %v248 = vunpack.c.l.b16 %v177
    %v249 = vunpack.c.l.b16 %v178
    %v250 = vunpack.c.l.b16 %v179
    %v251 = vunpack.c.l.b16 %v180
    %v252 = vunpack.c.l.b16 %v181
    %v253 = vunpack.c.l.b16 %v182
    %v254 = vunpack.c.l.b16 %v183
    %v255 = vunpack.c.l.b16 %v184
    %v256 = vunpack.c.l.b16 %v185
    %v257 = vunpack.c.l.b16 %v186
    %v258 = vpack.c.b16 %v227, %v226
    %v259 = vpack.c.b16 %v229, %v228
    %v260 = vpack.c.b16 %v231, %v230
    %v261 = vpack.c.b16 %v233, %v232
    %v262 = vpack.c.b16 %v235, %v234
    %v263 = vpack.c.b16 %v237, %v236
    %v264 = vpack.c.b16 %v239, %v238
    %v265 = vpack.c.b16 %v241, %v240
    %v266 = vpack.c.b16 %v243, %v242
    %v267 = vpack.c.b16 %v245, %v244
    %v268 = vpack.c.b16 %v247, %v246
    %v269 = vpack.c.b16 %v249, %v248
    %v270 = vpack.c.b16 %v251, %v250
    %v271 = vpack.c.b16 %v253, %v252
    %v272 = vpack.c.b16 %v255, %v254
    %v273 = vpack.c.b16 %v257, %v256
    %290 = vmatprep.subr.bf16.mxu0 0
    %291 = vmatpush1.bf16.msra.mxu0 %v258
    %292 = vmatprep.subr.bf16.mxu0 0
    %293 = vmatpush1.bf16.msra.mxu0 %v259
    %294 = vmatprep.subr.bf16.mxu0 0
    %295 = vmatpush1.bf16.msra.mxu0 %v260
    %296 = vmatprep.subr.bf16.mxu0 0
    %297 = vmatpush1.bf16.msra.mxu0 %v261
    %298 = vmatprep.subr.bf16.mxu0 0
    %299 = vmatpush1.bf16.msra.mxu0 %v262
    %300 = vmatprep.subr.bf16.mxu0 0
    %301 = vmatpush1.bf16.msra.mxu0 %v263
    %302 = vmatprep.subr.bf16.mxu0 0
    %303 = vmatpush1.bf16.msra.mxu0 %v264
    %304 = vmatprep.subr.bf16.mxu0 0
    %305 = vmatpush1.bf16.msra.mxu0 %v265
    %306 = vmatprep.subr.bf16.mxu0 0
    %307 = vmatpush1.bf16.msra.mxu0 %v266
    %308 = vmatprep.subr.bf16.mxu0 0
    %309 = vmatpush1.bf16.msra.mxu0 %v267
    %310 = vmatprep.subr.bf16.mxu0 0
    %311 = vmatpush1.bf16.msra.mxu0 %v268
    %312 = vmatprep.subr.bf16.mxu0 0
    %313 = vmatpush1.bf16.msra.mxu0 %v269
    %314 = vmatprep.subr.bf16.mxu0 0
    %315 = vmatpush1.bf16.msra.mxu0 %v270
    %316 = vmatprep.subr.bf16.mxu0 0
    %317 = vmatpush1.bf16.msra.mxu0 %v271
    %318 = vmatprep.subr.bf16.mxu0 0
    %319 = vmatpush1.bf16.msra.mxu0 %v272
    %320 = vmatprep.subr.bf16.mxu0 0
    %321 = vmatpush1.bf16.msra.mxu0 %v273
    %322 = vmatprep.mubr.bf16.mxu0 %v154
    %323 = vmatmul.mubr.bf16.gmra.mrb[0].mxu0 %v153
    %v324 = vpop.f32.mrb[0].mxu0
    %v325 = vadd.f32 %v192, %v324
    %v326 = vpop.f32.mrb[0].mxu0
    %v327 = vpop.f32.mrb[0].mxu0
    %v328 = vadd.f32 %v192, %v327
    %v329 = vpop.f32.mrb[0].mxu0
    %330 = vdwg.mxu0
    %v331 = vpack.c.bf16 %v328, %v325
    %v333 = vcombine.high %v331, %v331
    %v335 = vunpack.c.l.s4 1966171168
    %v336 = vunpack.c.0.s8 %v335
    %v337 = vlaneseq
    %v338 = vshrl.u32 %v337, 7
    %v339 = vsub.s32 %v336, %v338
    %v340 = vrot.slane %v331, %v339
    %v342 = vunpack.c.l.s4 1966171168
    %v343 = vunpack.c.0.s8 %v342
    %v344 = vlaneseq
    %v345 = vshrl.u32 %v344, 7
    %v346 = vsub.s32 %v343, %v345
    %v347 = vrot.slane %v333, %v346
    %v348 = vcombine.high %v340, %v340
    %v349 = vcombine.high %v347, %v347
    %v351 = vunpack.c.l.s4 1966171168
    %v352 = vunpack.c.0.s8 %v351
    %v353 = vlaneseq
    %v354 = vshrl.u32 %v353, 7
    %v355 = vsub.s32 %v352, %v354
    %v356 = vrot.slane %v340, %v355
    %v358 = vunpack.c.l.s4 1966171168
    %v359 = vunpack.c.0.s8 %v358
    %v360 = vlaneseq
    %v361 = vshrl.u32 %v360, 7
    %v362 = vsub.s32 %v359, %v361
    %v363 = vrot.slane %v347, %v362
    %v365 = vunpack.c.l.s4 1966171168
    %v366 = vunpack.c.0.s8 %v365
    %v367 = vlaneseq
    %v368 = vshrl.u32 %v367, 7
    %v369 = vsub.s32 %v366, %v368
    %v370 = vrot.slane %v348, %v369
    %v372 = vunpack.c.l.s4 1966171168
    %v373 = vunpack.c.0.s8 %v372
    %v374 = vlaneseq
    %v375 = vshrl.u32 %v374, 7
    %v376 = vsub.s32 %v373, %v375
    %v377 = vrot.slane %v349, %v376
    %v378 = vcombine.high %v356, %v356
    %v379 = vcombine.high %v363, %v363
    %v380 = vcombine.high %v370, %v370
    %v381 = vcombine.high %v377, %v377
    %390 = vst [vmem:[#allocation7] sm:$0x1] %v356
    %391 = vst [vmem:[#allocation7 + $0x1] sm:$0x1] %v370
    %392 = vst [vmem:[#allocation7 + $0x2] sm:$0x1] %v378
    %393 = vst [vmem:[#allocation7 + $0x3] sm:$0x1] %v380
    %394 = vst [vmem:[#allocation7 + $0x4] sm:$0x1] %v363
    %395 = vst [vmem:[#allocation7 + $0x5] sm:$0x1] %v377
    %396 = vst [vmem:[#allocation7 + $0x6] sm:$0x1] %v379
    %397 = vst [vmem:[#allocation7 + $0x7] sm:$0x1] %v381
    // Predicated region
    $region34: #{mlp_forward.1} parent=1 // pred_check
      _
    $region35: #{mlp_forward.1} parent=1 // pred_check_branch
      %399 = sbr.rel (0) target = $region37
    $region36: #{mlp_forward.1} parent=1 // pred_region
      // Predicated region
      $region38: #{mlp_forward.1} parent=36 // pred_check
        _
      $region39: #{mlp_forward.1} parent=36 // pred_check_branch
        %401 = sbr.rel (0) target = $region41
      $region40: #{mlp_forward.1} parent=36 // pred_region
        // Predicated region
        $region42: #{mlp_forward.1} parent=40 // pred_check
          _
        $region43: #{mlp_forward.1} parent=40 // pred_check_branch
          %403 = sbr.rel target = $region45
        $region44: #{mlp_forward.1} parent=40 // pred_region
          // Predicated region
          $region57: #{mlp_forward.1} parent=44 // pred_check
            _
          $region58: #{mlp_forward.1} parent=44 // pred_check_branch
            %418 = sbr.rel (0) target = $region60
          $region59: #{mlp_forward.1} parent=44 // pred_region
            loop: start=0, step=1, limit=1
            $region61: #{mlp_forward.1} parent=59 // loop_pre_header
              _
            $region62: #{mlp_forward.1} parent=59 // loop_header
              %s421 = sphi 0, %s425
              %p422 = scmp.ge.s32.totalorder %s421, 1
              %s426 = sphi [#allocation7], [#allocation7]
              %s427 = sphi %s5, %s5
            $region63: #{mlp_forward.1} parent=59 // loop_header_branch
              %424 = sbr.rel (%p422) target = $region67
            $region64: #{mlp_forward.1} parent=59 // loop_body
              %v428 = vld [vmem:[%s426] sm:$0x1]
              %429 = vst [vmem:[%s427] sm:$0x1] %v428
            $region65: #{mlp_forward.1} parent=59 // loop_footer
              %s425 = sadd.s32 1, %s421
            $region66: #{mlp_forward.1} parent=59 // loop_footer_branch
              %420 = sbr.rel target = $region62
            $region67: #{mlp_forward.1} parent=59 // loop_exit
              _
          $region60: #{mlp_forward.1} parent=44 // pred_fallthru
            _
        $region45: #{mlp_forward.1} parent=40 // pred_fallthru
          _
        // Predicated region
        $region46: #{mlp_forward.1} parent=40 // pred_check
          _
        $region47: #{mlp_forward.1} parent=40 // pred_check_branch
          %405 = sbr.rel (0) target = $region49
        $region48: #{mlp_forward.1} parent=40 // pred_region
          loop: start=0, step=1, limit=1
          $region50: #{mlp_forward.1} parent=48 // loop_pre_header
            _
          $region51: #{mlp_forward.1} parent=48 // loop_header
            %s408 = sphi 0, %s412
            %p409 = scmp.ge.s32.totalorder %s408, 1
            %s413 = sphi [#allocation7], [#allocation7]
            %s414 = sphi %s5, %s5
          $region52: #{mlp_forward.1} parent=48 // loop_header_branch
            %411 = sbr.rel (%p409) target = $region56
          $region53: #{mlp_forward.1} parent=48 // loop_body
            %v415 = vld [vmem:[%s413] sm:$0x1]
            %416 = vst [vmem:[%s414] sm:$0x1] %v415
          $region54: #{mlp_forward.1} parent=48 // loop_footer
            %s412 = sadd.s32 1, %s408
          $region55: #{mlp_forward.1} parent=48 // loop_footer_branch
            %407 = sbr.rel target = $region51
          $region56: #{mlp_forward.1} parent=48 // loop_exit
            _
        $region49: #{mlp_forward.1} parent=40 // pred_fallthru
          _
      $region41: #{mlp_forward.1} parent=36 // pred_fallthru
        _
      %430 = vnop
    $region37: #{mlp_forward.1} parent=1 // pred_fallthru
      _
    // Predicated region
    $region68: #{mlp_forward.1} parent=1 // pred_check
      _
    $region69: #{mlp_forward.1} parent=1 // pred_check_branch
      %432 = sbr.rel (0) target = $region71
    $region70: #{mlp_forward.1} parent=1 // pred_region
      _
    $region71: #{mlp_forward.1} parent=1 // pred_fallthru
      _
    %433 = vsyncpa [#allocation3], 1
    %434 = vsyncpa [#allocation5], 1

</llo_original>
